<compile_context>
chip_gen: v6e
topology: v6e:2x2x1
jax: 0.10.0
libtpu: 0.0.40
codegen_flags: <defaults>
</compile_context>

<pallas_src>
import math

import jax
import jax.numpy as jnp
from jax.experimental import pallas as pl
from jax.experimental.pallas import tpu as pltpu


ENC_OUT = 32                      # hidden width of every SingleInputEncoder + final encoder
MAX_TILE_B = 2048                 # max batch rows per grid step
TILE_QUANT = 256                  # batch-tile quantum (multiple of 128 -> unmasked out stores)
SINGLE_TILE_MAX = 1024            # below this: a single exact-fit tile (zero padding)
VMEM_BUDGET = 24 * 1024 * 1024    # soft budget used to cap tile_b (inputs lane-pad to 128)
VMEM_LIMIT = 32 * 1024 * 1024     # scoped-VMEM limit passed to Mosaic


def _round_up(x: int, m: int) -> int:
    return ((x + m - 1) // m) * m


def _cdiv(a: int, b: int) -> int:
    return -(-a // b)


# ----------------------------------------------------------------------------
# Kernel factory: whole SoftQNetwork forward on one [tile_b, ...] batch tile,
# built for a static number of input streams n (n-1 obs streams + the action).
# ----------------------------------------------------------------------------
def _make_soft_q_kernel(n: int):
    def kernel(*refs):
        x_refs = refs[0:n]                     # [tile_b, d_i] activations
        w_refs = refs[n:2 * n]                 # [d_i, 32]     per-stream weights
        b_refs = refs[2 * n:3 * n]             # [1, 32]       per-stream biases
        wf_ref, bf_ref, wq_ref, bq_ref, o_ref = refs[3 * n:]

        # Per-stream Linear+tanh encoders accumulated straight into the
        # final-encoder pre-activation via row-slices of Wf.  Mathematically
        # identical to concat(h_0..h_{n-1}) @ Wf, but with no concat and no
        # block-diagonal zero FLOPs.
        pre = bf_ref[...]                                              # [1, 32]
        for i in range(n):                                             # static unroll
            h_i = jnp.tanh(
                jnp.dot(x_refs[i][...], w_refs[i][...],
                        preferred_element_type=jnp.float32)
                + b_refs[i][...])                                      # [tile_b, 32]
            pre = pre + jnp.dot(
                h_i, wf_ref[i * ENC_OUT:(i + 1) * ENC_OUT, :],
                preferred_element_type=jnp.float32)                    # [tile_b, 32]
        enc = jnp.tanh(pre)                                            # [tile_b, 32]

        # Q head: contract the 32 features against the [1,32] weight row
        # (NT dot) so the result is produced directly in lane-dense
        # [1, tile_b] layout -> unmasked stores + dense output DMA.
        q = jax.lax.dot_general(
            wq_ref[...], enc, (((1,), (1,)), ((), ())),
            preferred_element_type=jnp.float32)                        # [1, tile_b]
        o_ref[...] = q + bq_ref[...]

    return kernel


# ----------------------------------------------------------------------------
# Parameter init (PyTorch-style uniform +-1/sqrt(fan_in)).
# ----------------------------------------------------------------------------
def init_soft_q_params(obs_dim, act_dim, key):
    input_dim = list(obs_dim) + [act_dim]       # InputEncoder(obs_dim + (act_dim,))
    n = len(input_dim)
    keys = jax.random.split(key, 2 * n + 4)

    enc_w, enc_b = [], []
    for i, d in enumerate(input_dim):
        bound = 1.0 / math.sqrt(d)
        enc_w.append(jax.random.uniform(keys[2 * i], (d, ENC_OUT),
                                        minval=-bound, maxval=bound, dtype=jnp.float32))
        enc_b.append(jax.random.uniform(keys[2 * i + 1], (1, ENC_OUT),
                                        minval=-bound, maxval=bound, dtype=jnp.float32))

    fan_in = n * ENC_OUT
    bound = 1.0 / math.sqrt(fan_in)
    final_w = jax.random.uniform(keys[-4], (fan_in, ENC_OUT),
                                 minval=-bound, maxval=bound, dtype=jnp.float32)
    final_b = jax.random.uniform(keys[-3], (1, ENC_OUT),
                                 minval=-bound, maxval=bound, dtype=jnp.float32)

    bound = 1.0 / math.sqrt(ENC_OUT)
    q_w = jax.random.uniform(keys[-2], (1, ENC_OUT),        # stored as a row (VPU/NT head)
                             minval=-bound, maxval=bound, dtype=jnp.float32)
    q_b = jax.random.uniform(keys[-1], (1, 1),
                             minval=-bound, maxval=bound, dtype=jnp.float32)

    return {"input_dim": tuple(input_dim),
            "enc_w": enc_w, "enc_b": enc_b,
            "final_w": final_w, "final_b": final_b,
            "q_w": q_w, "q_b": q_b}


# ----------------------------------------------------------------------------
# Batch tiling: fat tiles, small waste, >=2 steps for v7x once batch is large.
# ----------------------------------------------------------------------------
def _choose_batch_tiling(batch: int, n_streams: int):
    # VMEM per batch row (f32, last dim lane-padded to 128): double-buffered
    # input tile per stream plus a few tiles worth of intermediates/spills.
    bytes_per_row = (2 * n_streams + 4) * 128 * 4
    cap = (VMEM_BUDGET // bytes_per_row) // TILE_QUANT * TILE_QUANT
    cap = max(TILE_QUANT, min(MAX_TILE_B, cap))

    if batch <= min(cap, SINGLE_TILE_MAX):
        return batch, 1                       # one exact tile: no padding, no OOB rows

    num_tiles = max(_cdiv(batch, cap), 2)     # >=2 grid steps so v7x's 2nd TC gets work
    tile_b = _round_up(_cdiv(batch, num_tiles), TILE_QUANT)
    return tile_b, _cdiv(batch, tile_b)       # last block may be ragged (rows dropped)


# ----------------------------------------------------------------------------
# Wrapper: SoftQNetwork.forward(obs, action) -> Q value [B, 1] (or [1]).
# ----------------------------------------------------------------------------
def soft_q_forward(params, obs, action):
    inputs = list(obs) + [action]             # state = obs.copy(); state.append(action)
    n = len(inputs)
    batched = inputs[0].ndim > 1

    xs = [jnp.asarray(a, jnp.float32) for a in inputs]
    if not batched:
        xs = [a[None, :] for a in xs]
    batch = xs[0].shape[0]
    dims = [int(a.shape[-1]) for a in xs]

    tile_b, num_tiles = _choose_batch_tiling(batch, n)
    resident = lambda i: (0, 0)               # weights stay in VMEM across grid steps

    in_specs = (
        [pl.BlockSpec((tile_b, d), lambda i: (i, 0)) for d in dims]       # x streams
        + [pl.BlockSpec((d, ENC_OUT), resident) for d in dims]            # enc weights
        + [pl.BlockSpec((1, ENC_OUT), resident) for _ in dims]            # enc biases
        + [pl.BlockSpec((n * ENC_OUT, ENC_OUT), resident),                # Wf
           pl.BlockSpec((1, ENC_OUT), resident),                          # bf
           pl.BlockSpec((1, ENC_OUT), resident),                          # Wq (row)
           pl.BlockSpec((1, 1), resident)])                               # bq

    out = pl.pallas_call(
        _make_soft_q_kernel(n),
        out_shape=jax.ShapeDtypeStruct((1, num_tiles * tile_b), jnp.float32),
        grid=(num_tiles,),
        in_specs=in_specs,
        out_specs=pl.BlockSpec((1, tile_b), lambda i: (0, i)),            # lane-dense rows
        compiler_params=pltpu.CompilerParams(
            dimension_semantics=("parallel",),        # megacore-shard the batch on v7x
            vmem_limit_bytes=VMEM_LIMIT),
    )(*xs, *params["enc_w"], *params["enc_b"],
      params["final_w"], params["final_b"], params["q_w"], params["q_b"])

    q = out[0, :batch][:, None]               # [B, 1]
    if not batched:
        q = q[0]                              # [1]
    return q


# ----------------------------------------------------------------------------
# Pure-JAX reference (per-stream, mirrors the PyTorch module exactly).
# ----------------------------------------------------------------------------
def _reference_forward(params, obs, action):
    inputs = list(obs) + [action]
    batched = inputs[0].ndim > 1
    xs = [jnp.asarray(a, jnp.float32) for a in inputs]
    if not batched:
        xs = [a[None, :] for a in xs]
    encs = [jnp.tanh(a @ w + b)
            for a, w, b in zip(xs, params["enc_w"], params["enc_b"])]
    enc = jnp.concatenate(encs, axis=-1)
    h = jnp.tanh(enc @ params["final_w"] + params["final_b"])
    q = h @ params["q_w"].T + params["q_b"]
    if not batched:
        q = q[0]
    return q


if __name__ == "__main__":
    key = jax.random.PRNGKey(0)
    k_params, k0, k1, k2, ka, kb = jax.random.split(key, 6)

    obs_dim = [6, 10, 4]        # three observation streams
    act_dim = 4
    batch = 2

    params = init_soft_q_params(obs_dim, act_dim, k_params)

    # --- small batched inputs -------------------------------------------------
    obs = [jax.random.normal(k0, (batch, obs_dim[0]), dtype=jnp.float32),
           jax.random.normal(k1, (batch, obs_dim[1]), dtype=jnp.float32),
           jax.random.normal(k2, (batch, obs_dim[2]), dtype=jnp.float32)]
    action = jax.random.normal(ka, (batch, act_dim), dtype=jnp.float32)

    q = soft_q_forward(params, obs, action)
    jax.block_until_ready(q)
    assert q.shape == (batch, 1), q.shape
    q_ref = _reference_forward(params, obs, action)
    assert jnp.allclose(q, q_ref, atol=1e-5, rtol=1e-5), (
        f"max abs err {jnp.max(jnp.abs(q - q_ref))}")

    # --- unbatched inputs (second branch of the torch forward) ----------------
    q_1d = soft_q_forward(params, [x[0] for x in obs], action[0])
    jax.block_until_ready(q_1d)
    assert q_1d.shape == (1,), q_1d.shape
    assert jnp.allclose(q_1d, q[0], atol=1e-5, rtol=1e-5)

    # --- larger batch: exercises the multi-tile / ragged-last-block path ------
    big = 1300
    kbs = jax.random.split(kb, 4)
    obs_big = [jax.random.normal(kbs[j], (big, obs_dim[j]), dtype=jnp.float32)
               for j in range(3)]
    act_big = jax.random.normal(kbs[3], (big, act_dim), dtype=jnp.float32)
    q_big = soft_q_forward(params, obs_big, act_big)
    jax.block_until_ready(q_big)
    assert q_big.shape == (big, 1), q_big.shape
    q_big_ref = _reference_forward(params, obs_big, act_big)
    assert jnp.allclose(q_big, q_big_ref, atol=1e-5, rtol=1e-5), (
        f"max abs err {jnp.max(jnp.abs(q_big - q_big_ref))}")

    print("KERNEL_OK")
</pallas_src>

<mosaic_0001>
module attributes {stable_mosaic.version = 11 : i64} {
  func.func @kernel(%arg0: i32, %arg1: memref<2x6xf32, #tpu.memory_space<vmem>>, %arg2: memref<2x10xf32, #tpu.memory_space<vmem>>, %arg3: memref<2x4xf32, #tpu.memory_space<vmem>>, %arg4: memref<2x4xf32, #tpu.memory_space<vmem>>, %arg5: memref<6x32xf32, #tpu.memory_space<vmem>>, %arg6: memref<10x32xf32, #tpu.memory_space<vmem>>, %arg7: memref<4x32xf32, #tpu.memory_space<vmem>>, %arg8: memref<4x32xf32, #tpu.memory_space<vmem>>, %arg9: memref<1x32xf32, #tpu.memory_space<vmem>>, %arg10: memref<1x32xf32, #tpu.memory_space<vmem>>, %arg11: memref<1x32xf32, #tpu.memory_space<vmem>>, %arg12: memref<1x32xf32, #tpu.memory_space<vmem>>, %arg13: memref<128x32xf32, #tpu.memory_space<vmem>>, %arg14: memref<1x32xf32, #tpu.memory_space<vmem>>, %arg15: memref<1x32xf32, #tpu.memory_space<vmem>>, %arg16: memref<1x1xf32, #tpu.memory_space<vmem>>, %arg17: memref<1x2xf32, #tpu.memory_space<vmem>>) attributes {dimension_semantics = [#tpu.dimension_semantics<parallel>], iteration_bounds = array<i64: 1>, scalar_prefetch = 0 : i64, scratch_operands = 0 : i64, tpu.core_type = #tpu.core_type<tc>, window_params = [{transform_indices = @transform_0, window_bounds = array<i64: 2, 6>}, {transform_indices = @transform_1, window_bounds = array<i64: 2, 10>}, {transform_indices = @transform_2, window_bounds = array<i64: 2, 4>}, {transform_indices = @transform_3, window_bounds = array<i64: 2, 4>}, {pipeline_mode = #tpu.pipeline_mode<synchronous>, transform_indices = @transform_4, window_bounds = array<i64: 6, 32>}, {pipeline_mode = #tpu.pipeline_mode<synchronous>, transform_indices = @transform_5, window_bounds = array<i64: 10, 32>}, {pipeline_mode = #tpu.pipeline_mode<synchronous>, transform_indices = @transform_6, window_bounds = array<i64: 4, 32>}, {pipeline_mode = #tpu.pipeline_mode<synchronous>, transform_indices = @transform_7, window_bounds = array<i64: 4, 32>}, {pipeline_mode = #tpu.pipeline_mode<synchronous>, transform_indices = @transform_8, window_bounds = array<i64: 1, 32>}, {pipeline_mode = #tpu.pipeline_mode<synchronous>, transform_indices = @transform_9, window_bounds = array<i64: 1, 32>}, {pipeline_mode = #tpu.pipeline_mode<synchronous>, transform_indices = @transform_10, window_bounds = array<i64: 1, 32>}, {pipeline_mode = #tpu.pipeline_mode<synchronous>, transform_indices = @transform_11, window_bounds = array<i64: 1, 32>}, {pipeline_mode = #tpu.pipeline_mode<synchronous>, transform_indices = @transform_12, window_bounds = array<i64: 128, 32>}, {pipeline_mode = #tpu.pipeline_mode<synchronous>, transform_indices = @transform_13, window_bounds = array<i64: 1, 32>}, {pipeline_mode = #tpu.pipeline_mode<synchronous>, transform_indices = @transform_14, window_bounds = array<i64: 1, 32>}, {pipeline_mode = #tpu.pipeline_mode<synchronous>, transform_indices = @transform_15, window_bounds = array<i64: 1, 1>}, {transform_indices = @transform_16, window_bounds = array<i64: 1, 2>}]} {
    %c0 = arith.constant 0 : index
    %c0_0 = arith.constant 0 : index
    %0 = vector.load %arg14[%c0, %c0_0] : memref<1x32xf32, #tpu.memory_space<vmem>>, vector<1x32xf32>
    %c0_1 = arith.constant 0 : index
    %c0_2 = arith.constant 0 : index
    %1 = vector.load %arg1[%c0_1, %c0_2] : memref<2x6xf32, #tpu.memory_space<vmem>>, vector<2x6xf32>
    %c0_3 = arith.constant 0 : index
    %c0_4 = arith.constant 0 : index
    %2 = vector.load %arg5[%c0_3, %c0_4] : memref<6x32xf32, #tpu.memory_space<vmem>>, vector<6x32xf32>
    %cst = arith.constant dense<0.000000e+00> : vector<2x32xf32>
    %3 = tpu.matmul %1, %2, %cst {dimension_numbers = #tpu.dot_dimension_numbers<[1], [0], [0], [1], [0, 0, 1, 1], [], []>} : vector<2x6xf32>, vector<6x32xf32>, vector<2x32xf32> -> vector<2x32xf32>
    %c0_5 = arith.constant 0 : index
    %c0_6 = arith.constant 0 : index
    %4 = vector.load %arg9[%c0_5, %c0_6] : memref<1x32xf32, #tpu.memory_space<vmem>>, vector<1x32xf32>
    %5 = vector.broadcast %4 : vector<1x32xf32> to vector<2x32xf32>
    %6 = arith.addf %3, %5 : vector<2x32xf32>
    %7 = math.tanh %6 : vector<2x32xf32>
    %c0_7 = arith.constant 0 : index
    %c0_8 = arith.constant 0 : index
    %8 = vector.load %arg13[%c0_7, %c0_8] : memref<128x32xf32, #tpu.memory_space<vmem>>, vector<32x32xf32>
    %cst_9 = arith.constant dense<0.000000e+00> : vector<2x32xf32>
    %9 = tpu.matmul %7, %8, %cst_9 {dimension_numbers = #tpu.dot_dimension_numbers<[1], [0], [0], [1], [0, 0, 1, 1], [], []>} : vector<2x32xf32>, vector<32x32xf32>, vector<2x32xf32> -> vector<2x32xf32>
    %10 = vector.broadcast %0 : vector<1x32xf32> to vector<2x32xf32>
    %11 = arith.addf %10, %9 : vector<2x32xf32>
    %c0_10 = arith.constant 0 : index
    %c0_11 = arith.constant 0 : index
    %12 = vector.load %arg2[%c0_10, %c0_11] : memref<2x10xf32, #tpu.memory_space<vmem>>, vector<2x10xf32>
    %c0_12 = arith.constant 0 : index
    %c0_13 = arith.constant 0 : index
    %13 = vector.load %arg6[%c0_12, %c0_13] : memref<10x32xf32, #tpu.memory_space<vmem>>, vector<10x32xf32>
    %cst_14 = arith.constant dense<0.000000e+00> : vector<2x32xf32>
    %14 = tpu.matmul %12, %13, %cst_14 {dimension_numbers = #tpu.dot_dimension_numbers<[1], [0], [0], [1], [0, 0, 1, 1], [], []>} : vector<2x10xf32>, vector<10x32xf32>, vector<2x32xf32> -> vector<2x32xf32>
    %c0_15 = arith.constant 0 : index
    %c0_16 = arith.constant 0 : index
    %15 = vector.load %arg10[%c0_15, %c0_16] : memref<1x32xf32, #tpu.memory_space<vmem>>, vector<1x32xf32>
    %16 = vector.broadcast %15 : vector<1x32xf32> to vector<2x32xf32>
    %17 = arith.addf %14, %16 : vector<2x32xf32>
    %18 = math.tanh %17 : vector<2x32xf32>
    %c32 = arith.constant 32 : index
    %c0_17 = arith.constant 0 : index
    %19 = vector.load %arg13[%c32, %c0_17] : memref<128x32xf32, #tpu.memory_space<vmem>>, vector<32x32xf32>
    %cst_18 = arith.constant dense<0.000000e+00> : vector<2x32xf32>
    %20 = tpu.matmul %18, %19, %cst_18 {dimension_numbers = #tpu.dot_dimension_numbers<[1], [0], [0], [1], [0, 0, 1, 1], [], []>} : vector<2x32xf32>, vector<32x32xf32>, vector<2x32xf32> -> vector<2x32xf32>
    %21 = arith.addf %11, %20 : vector<2x32xf32>
    %c0_19 = arith.constant 0 : index
    %c0_20 = arith.constant 0 : index
    %22 = vector.load %arg3[%c0_19, %c0_20] : memref<2x4xf32, #tpu.memory_space<vmem>>, vector<2x4xf32>
    %c0_21 = arith.constant 0 : index
    %c0_22 = arith.constant 0 : index
    %23 = vector.load %arg7[%c0_21, %c0_22] : memref<4x32xf32, #tpu.memory_space<vmem>>, vector<4x32xf32>
    %cst_23 = arith.constant dense<0.000000e+00> : vector<2x32xf32>
    %24 = tpu.matmul %22, %23, %cst_23 {dimension_numbers = #tpu.dot_dimension_numbers<[1], [0], [0], [1], [0, 0, 1, 1], [], []>} : vector<2x4xf32>, vector<4x32xf32>, vector<2x32xf32> -> vector<2x32xf32>
    %c0_24 = arith.constant 0 : index
    %c0_25 = arith.constant 0 : index
    %25 = vector.load %arg11[%c0_24, %c0_25] : memref<1x32xf32, #tpu.memory_space<vmem>>, vector<1x32xf32>
    %26 = vector.broadcast %25 : vector<1x32xf32> to vector<2x32xf32>
    %27 = arith.addf %24, %26 : vector<2x32xf32>
    %28 = math.tanh %27 : vector<2x32xf32>
    %c64 = arith.constant 64 : index
    %c0_26 = arith.constant 0 : index
    %29 = vector.load %arg13[%c64, %c0_26] : memref<128x32xf32, #tpu.memory_space<vmem>>, vector<32x32xf32>
    %cst_27 = arith.constant dense<0.000000e+00> : vector<2x32xf32>
    %30 = tpu.matmul %28, %29, %cst_27 {dimension_numbers = #tpu.dot_dimension_numbers<[1], [0], [0], [1], [0, 0, 1, 1], [], []>} : vector<2x32xf32>, vector<32x32xf32>, vector<2x32xf32> -> vector<2x32xf32>
    %31 = arith.addf %21, %30 : vector<2x32xf32>
    %c0_28 = arith.constant 0 : index
    %c0_29 = arith.constant 0 : index
    %32 = vector.load %arg4[%c0_28, %c0_29] : memref<2x4xf32, #tpu.memory_space<vmem>>, vector<2x4xf32>
    %c0_30 = arith.constant 0 : index
    %c0_31 = arith.constant 0 : index
    %33 = vector.load %arg8[%c0_30, %c0_31] : memref<4x32xf32, #tpu.memory_space<vmem>>, vector<4x32xf32>
    %cst_32 = arith.constant dense<0.000000e+00> : vector<2x32xf32>
    %34 = tpu.matmul %32, %33, %cst_32 {dimension_numbers = #tpu.dot_dimension_numbers<[1], [0], [0], [1], [0, 0, 1, 1], [], []>} : vector<2x4xf32>, vector<4x32xf32>, vector<2x32xf32> -> vector<2x32xf32>
    %c0_33 = arith.constant 0 : index
    %c0_34 = arith.constant 0 : index
    %35 = vector.load %arg12[%c0_33, %c0_34] : memref<1x32xf32, #tpu.memory_space<vmem>>, vector<1x32xf32>
    %36 = vector.broadcast %35 : vector<1x32xf32> to vector<2x32xf32>
    %37 = arith.addf %34, %36 : vector<2x32xf32>
    %38 = math.tanh %37 : vector<2x32xf32>
    %c96 = arith.constant 96 : index
    %c0_35 = arith.constant 0 : index
    %39 = vector.load %arg13[%c96, %c0_35] : memref<128x32xf32, #tpu.memory_space<vmem>>, vector<32x32xf32>
    %cst_36 = arith.constant dense<0.000000e+00> : vector<2x32xf32>
    %40 = tpu.matmul %38, %39, %cst_36 {dimension_numbers = #tpu.dot_dimension_numbers<[1], [0], [0], [1], [0, 0, 1, 1], [], []>} : vector<2x32xf32>, vector<32x32xf32>, vector<2x32xf32> -> vector<2x32xf32>
    %41 = arith.addf %31, %40 : vector<2x32xf32>
    %42 = math.tanh %41 : vector<2x32xf32>
    %c0_37 = arith.constant 0 : index
    %c0_38 = arith.constant 0 : index
    %43 = vector.load %arg15[%c0_37, %c0_38] : memref<1x32xf32, #tpu.memory_space<vmem>>, vector<1x32xf32>
    %cst_39 = arith.constant dense<0.000000e+00> : vector<1x2xf32>
    %44 = tpu.matmul %43, %42, %cst_39 {dimension_numbers = #tpu.dot_dimension_numbers<[1], [1], [0], [0], [0, 0, 1, 0], [], []>} : vector<1x32xf32>, vector<2x32xf32>, vector<1x2xf32> -> vector<1x2xf32>
    %c0_40 = arith.constant 0 : index
    %c0_41 = arith.constant 0 : index
    %45 = vector.load %arg16[%c0_40, %c0_41] : memref<1x1xf32, #tpu.memory_space<vmem>>, vector<1x1xf32>
    %46 = vector.broadcast %45 : vector<1x1xf32> to vector<1x2xf32>
    %47 = arith.addf %44, %46 : vector<1x2xf32>
    %c0_42 = arith.constant 0 : index
    %c0_43 = arith.constant 0 : index
    %48 = vector.load %arg17[%c0_42, %c0_43] : memref<1x2xf32, #tpu.memory_space<vmem>>, vector<1x2xf32>
    tpu.vector_store %arg17[%c0_42, %c0_43], %47 {strides = array<i32>} : memref<1x2xf32, #tpu.memory_space<vmem>>, vector<1x2xf32>,
    return
  }
  func.func @transform_0(%arg0: i32) -> (i32, i32) {
    %c0_i32 = arith.constant 0 : i32
    %c0_i32_0 = arith.constant 0 : i32
    return %arg0, %c0_i32 : i32, i32
  }
  func.func @transform_1(%arg0: i32) -> (i32, i32) {
    %c0_i32 = arith.constant 0 : i32
    %c0_i32_0 = arith.constant 0 : i32
    return %arg0, %c0_i32 : i32, i32
  }
  func.func @transform_2(%arg0: i32) -> (i32, i32) {
    %c0_i32 = arith.constant 0 : i32
    %c0_i32_0 = arith.constant 0 : i32
    return %arg0, %c0_i32 : i32, i32
  }
  func.func @transform_3(%arg0: i32) -> (i32, i32) {
    %c0_i32 = arith.constant 0 : i32
    %c0_i32_0 = arith.constant 0 : i32
    return %arg0, %c0_i32 : i32, i32
  }
  func.func @transform_4(%arg0: i32) -> (i32, i32) {
    %c0_i32 = arith.constant 0 : i32
    %c0_i32_0 = arith.constant 0 : i32
    %c0_i32_1 = arith.constant 0 : i32
    return %c0_i32, %c0_i32_0 : i32, i32
  }
  func.func @transform_5(%arg0: i32) -> (i32, i32) {
    %c0_i32 = arith.constant 0 : i32
    %c0_i32_0 = arith.constant 0 : i32
    %c0_i32_1 = arith.constant 0 : i32
    return %c0_i32, %c0_i32_0 : i32, i32
  }
  func.func @transform_6(%arg0: i32) -> (i32, i32) {
    %c0_i32 = arith.constant 0 : i32
    %c0_i32_0 = arith.constant 0 : i32
    %c0_i32_1 = arith.constant 0 : i32
    return %c0_i32, %c0_i32_0 : i32, i32
  }
  func.func @transform_7(%arg0: i32) -> (i32, i32) {
    %c0_i32 = arith.constant 0 : i32
    %c0_i32_0 = arith.constant 0 : i32
    %c0_i32_1 = arith.constant 0 : i32
    return %c0_i32, %c0_i32_0 : i32, i32
  }
  func.func @transform_8(%arg0: i32) -> (i32, i32) {
    %c0_i32 = arith.constant 0 : i32
    %c0_i32_0 = arith.constant 0 : i32
    %c0_i32_1 = arith.constant 0 : i32
    return %c0_i32, %c0_i32_0 : i32, i32
  }
  func.func @transform_9(%arg0: i32) -> (i32, i32) {
    %c0_i32 = arith.constant 0 : i32
    %c0_i32_0 = arith.constant 0 : i32
    %c0_i32_1 = arith.constant 0 : i32
    return %c0_i32, %c0_i32_0 : i32, i32
  }
  func.func @transform_10(%arg0: i32) -> (i32, i32) {
    %c0_i32 = arith.constant 0 : i32
    %c0_i32_0 = arith.constant 0 : i32
    %c0_i32_1 = arith.constant 0 : i32
    return %c0_i32, %c0_i32_0 : i32, i32
  }
  func.func @transform_11(%arg0: i32) -> (i32, i32) {
    %c0_i32 = arith.constant 0 : i32
    %c0_i32_0 = arith.constant 0 : i32
    %c0_i32_1 = arith.constant 0 : i32
    return %c0_i32, %c0_i32_0 : i32, i32
  }
  func.func @transform_12(%arg0: i32) -> (i32, i32) {
    %c0_i32 = arith.constant 0 : i32
    %c0_i32_0 = arith.constant 0 : i32
    %c0_i32_1 = arith.constant 0 : i32
    return %c0_i32, %c0_i32_0 : i32, i32
  }
  func.func @transform_13(%arg0: i32) -> (i32, i32) {
    %c0_i32 = arith.constant 0 : i32
    %c0_i32_0 = arith.constant 0 : i32
    %c0_i32_1 = arith.constant 0 : i32
    return %c0_i32, %c0_i32_0 : i32, i32
  }
  func.func @transform_14(%arg0: i32) -> (i32, i32) {
    %c0_i32 = arith.constant 0 : i32
    %c0_i32_0 = arith.constant 0 : i32
    %c0_i32_1 = arith.constant 0 : i32
    return %c0_i32, %c0_i32_0 : i32, i32
  }
  func.func @transform_15(%arg0: i32) -> (i32, i32) {
    %c0_i32 = arith.constant 0 : i32
    %c0_i32_0 = arith.constant 0 : i32
    %c0_i32_1 = arith.constant 0 : i32
    return %c0_i32, %c0_i32_0 : i32, i32
  }
  func.func @transform_16(%arg0: i32) -> (i32, i32) {
    %c0_i32 = arith.constant 0 : i32
    %c0_i32_0 = arith.constant 0 : i32
    return %c0_i32, %arg0 : i32, i32
  }
}

</mosaic_0001>

<llo_original>
// kernel: tpu_custom_call.1
$region0: #{tpu_custom_call.1}
  #allocation0 [shape = 'u32[]', space=smem, size = 0x4, offset = 0x4, fixed_abs, tag = 'smem constant byte address 0x4 - core index']
  #allocation1 [shape = 'u32[144,128]{1,0:T(1,128)}', space=vmem, size = 0x12000, scoped, tag = 'internal scratch']
  #allocation2 [shape = 'f32[1,1]{1,0:T(1,128)S(1)}', space=vmem, size = 0x200, scoped, tag = 'scoped memory for tpu_custom_call.1']
  %s0 = inlined_call_operand.vmem [shape: f32[2,6], index: 0, kind: input, shape index: {}]
  %s1 = inlined_call_operand.vmem [shape: f32[2,10], index: 1, kind: input, shape index: {}]
  %s2 = inlined_call_operand.vmem [shape: f32[2,4], index: 2, kind: input, shape index: {}]
  %s3 = inlined_call_operand.vmem [shape: f32[2,4], index: 3, kind: input, shape index: {}]
  %s4 = inlined_call_operand.vmem [shape: f32[6,32], index: 4, kind: input, shape index: {}]
  %s5 = inlined_call_operand.vmem [shape: f32[10,32], index: 5, kind: input, shape index: {}]
  %s6 = inlined_call_operand.vmem [shape: f32[4,32], index: 6, kind: input, shape index: {}]
  %s7 = inlined_call_operand.vmem [shape: f32[4,32], index: 7, kind: input, shape index: {}]
  %s8 = inlined_call_operand.vmem [shape: f32[1,32], index: 8, kind: input, shape index: {}]
  %s9 = inlined_call_operand.vmem [shape: f32[1,32], index: 9, kind: input, shape index: {}]
  %s10 = inlined_call_operand.vmem [shape: f32[1,32], index: 10, kind: input, shape index: {}]
  %s11 = inlined_call_operand.vmem [shape: f32[1,32], index: 11, kind: input, shape index: {}]
  %s12 = inlined_call_operand.vmem [shape: f32[128,32], index: 12, kind: input, shape index: {}]
  %s13 = inlined_call_operand.vmem [shape: f32[1,32], index: 13, kind: input, shape index: {}]
  %s14 = inlined_call_operand.vmem [shape: f32[1,32], index: 14, kind: input, shape index: {}]
  %s15 = inlined_call_operand.<no memory space> [shape: f32[1,1], index: 15, kind: input, shape index: {}]
  %s16 = inlined_call_operand.hbm [shape: f32[1,2], index: 16, kind: output, shape index: {}]
  %s17 = sld [smem:[#allocation0]]
  $region74: #{tpu_custom_call.1} parent=0
    _
  %s19 = ssub.s32 1, %s17
  %s20 = scalar_select 0, %s19, %s17
  %v21 = vstv %s15
  %22 = vst [vmem:[#allocation2] sm:$0x1] %v21
  $region1: #{tpu_custom_call.1} parent=0
    #allocation3 [shape = 'u8[512]{0}', space=vmem, size = 0x400, scoped, tag = 'output window, operand 0, single buffered']
    #allocation4 [shape = 's32[1]{0}', space=sflag, size = 0x4, scoped, tag = 'scoped memory for tpu_custom_call.1']
    %23 = vsyncpa [#allocation4], 0
    // Predicated region
    $region2: #{tpu_custom_call.1} parent=1 // pred_check
      _
    $region3: #{tpu_custom_call.1} parent=1 // pred_check_branch
      %25 = sbr.rel (0) target = $region5
    $region4: #{tpu_custom_call.1} parent=1 // pred_region
      _
    $region5: #{tpu_custom_call.1} parent=1 // pred_fallthru
      _
    // Predicated region
    $region6: #{tpu_custom_call.1} parent=1 // pred_check
      _
    $region7: #{tpu_custom_call.1} parent=1 // pred_check_branch
      %27 = sbr.rel (0) target = $region9
    $region8: #{tpu_custom_call.1} parent=1 // pred_region
      _
    $region9: #{tpu_custom_call.1} parent=1 // pred_fallthru
      _
    // Predicated region
    $region10: #{tpu_custom_call.1} parent=1 // pred_check
      _
    $region11: #{tpu_custom_call.1} parent=1 // pred_check_branch
      %29 = sbr.rel (0) target = $region13
    $region12: #{tpu_custom_call.1} parent=1 // pred_region
      _
    $region13: #{tpu_custom_call.1} parent=1 // pred_fallthru
      _
    // Predicated region
    $region14: #{tpu_custom_call.1} parent=1 // pred_check
      _
    $region15: #{tpu_custom_call.1} parent=1 // pred_check_branch
      %31 = sbr.rel (0) target = $region17
    $region16: #{tpu_custom_call.1} parent=1 // pred_region
      _
    $region17: #{tpu_custom_call.1} parent=1 // pred_fallthru
      _
    // Predicated region
    $region18: #{tpu_custom_call.1} parent=1 // pred_check
      _
    $region19: #{tpu_custom_call.1} parent=1 // pred_check_branch
      %33 = sbr.rel (0) target = $region21
    $region20: #{tpu_custom_call.1} parent=1 // pred_region
      _
    $region21: #{tpu_custom_call.1} parent=1 // pred_fallthru
      _
    // Predicated region
    $region22: #{tpu_custom_call.1} parent=1 // pred_check
      _
    $region23: #{tpu_custom_call.1} parent=1 // pred_check_branch
      %35 = sbr.rel (0) target = $region25
    $region24: #{tpu_custom_call.1} parent=1 // pred_region
      _
    $region25: #{tpu_custom_call.1} parent=1 // pred_fallthru
      _
    // Predicated region
    $region26: #{tpu_custom_call.1} parent=1 // pred_check
      _
    $region27: #{tpu_custom_call.1} parent=1 // pred_check_branch
      %37 = sbr.rel (0) target = $region29
    $region28: #{tpu_custom_call.1} parent=1 // pred_region
      _
    $region29: #{tpu_custom_call.1} parent=1 // pred_fallthru
      _
    // Predicated region
    $region30: #{tpu_custom_call.1} parent=1 // pred_check
      _
    $region31: #{tpu_custom_call.1} parent=1 // pred_check_branch
      %39 = sbr.rel (0) target = $region33
    $region32: #{tpu_custom_call.1} parent=1 // pred_region
      _
    $region33: #{tpu_custom_call.1} parent=1 // pred_fallthru
      _
    // Predicated region
    $region34: #{tpu_custom_call.1} parent=1 // pred_check
      _
    $region35: #{tpu_custom_call.1} parent=1 // pred_check_branch
      %41 = sbr.rel (0) target = $region37
    $region36: #{tpu_custom_call.1} parent=1 // pred_region
      _
    $region37: #{tpu_custom_call.1} parent=1 // pred_fallthru
      _
    // Predicated region
    $region38: #{tpu_custom_call.1} parent=1 // pred_check
      _
    $region39: #{tpu_custom_call.1} parent=1 // pred_check_branch
      %43 = sbr.rel (0) target = $region41
    $region40: #{tpu_custom_call.1} parent=1 // pred_region
      _
    $region41: #{tpu_custom_call.1} parent=1 // pred_fallthru
      _
    // Predicated region
    $region42: #{tpu_custom_call.1} parent=1 // pred_check
      _
    $region43: #{tpu_custom_call.1} parent=1 // pred_check_branch
      %45 = sbr.rel (0) target = $region45
    $region44: #{tpu_custom_call.1} parent=1 // pred_region
      _
    $region45: #{tpu_custom_call.1} parent=1 // pred_fallthru
      _
    // Predicated region
    $region46: #{tpu_custom_call.1} parent=1 // pred_check
      _
    $region47: #{tpu_custom_call.1} parent=1 // pred_check_branch
      %47 = sbr.rel (0) target = $region49
    $region48: #{tpu_custom_call.1} parent=1 // pred_region
      _
    $region49: #{tpu_custom_call.1} parent=1 // pred_fallthru
      _
    // Predicated region
    $region50: #{tpu_custom_call.1} parent=1 // pred_check
      _
    $region51: #{tpu_custom_call.1} parent=1 // pred_check_branch
      %49 = sbr.rel (0) target = $region53
    $region52: #{tpu_custom_call.1} parent=1 // pred_region
      _
    $region53: #{tpu_custom_call.1} parent=1 // pred_fallthru
      _
    // Predicated region
    $region54: #{tpu_custom_call.1} parent=1 // pred_check
      _
    $region55: #{tpu_custom_call.1} parent=1 // pred_check_branch
      %51 = sbr.rel (0) target = $region57
    $region56: #{tpu_custom_call.1} parent=1 // pred_region
      _
    $region57: #{tpu_custom_call.1} parent=1 // pred_fallthru
      _
    // Predicated region
    $region58: #{tpu_custom_call.1} parent=1 // pred_check
      _
    $region59: #{tpu_custom_call.1} parent=1 // pred_check_branch
      %53 = sbr.rel (0) target = $region61
    $region60: #{tpu_custom_call.1} parent=1 // pred_region
      _
    $region61: #{tpu_custom_call.1} parent=1 // pred_fallthru
      _
    // Predicated region
    $region62: #{tpu_custom_call.1} parent=1 // pred_check
      _
    $region63: #{tpu_custom_call.1} parent=1 // pred_check_branch
      %55 = sbr.rel (0) target = $region65
    $region64: #{tpu_custom_call.1} parent=1 // pred_region
      _
    $region65: #{tpu_custom_call.1} parent=1 // pred_fallthru
      _
    %v56 = vld [vmem:[%s13] sm:$0x1]
    %v57 = vld [vmem:[%s0] sm:$0x3]
    %v58 = vld [vmem:[%s4] sm:$0x3f]
    %v59 = vld [vmem:[%s8] sm:$0x1]
    %v61 = vlaneseq
    %v62 = vshrl.u32 %v61, 7
    %v63 = vsub.s32 0, %v62
    %v64 = vrot.slane %v59, %v63
    %vm66 = vcmask 48128
    %v68 = vsel %vm66, %v57, 0
    %vm70 = vcmask 1045504
    %v72 = vsel %vm70, %v58, 0
    %74 = vmatprep.subr.mxu0 0.0
    %75 = vmatpush1.msra.mxu0 0.0
    %76 = vmatprep.subr.mxu0 0.0
    %77 = vmatpush1.msra.mxu0 0.0
    %78 = vmatprep.subr.mxu0 0.0
    %79 = vmatpush1.msra.mxu0 0.0
    %80 = vmatprep.subr.mxu0 0.0
    %81 = vmatpush1.msra.mxu0 0.0
    %82 = vmatprep.subr.mxu0 0.0
    %83 = vmatpush1.msra.mxu0 0.0
    %84 = vmatprep.subr.mxu0 0.0
    %85 = vmatpush1.msra.mxu0 0.0
    %86 = vmatprep.subr.mxu0 0.0
    %87 = vmatpush1.msra.mxu0 0.0
    %88 = vmatprep.subr.mxu0 0.0
    %89 = vmatpush1.msra.mxu0 0.0
    %90 = vmatprep.subr.mxu0 0.0
    %91 = vmatpush1.msra.mxu0 0.0
    %92 = vmatprep.subr.mxu0 0.0
    %93 = vmatpush1.msra.mxu0 0.0
    %94 = vmatprep.subr.mxu0 0.0
    %95 = vmatpush1.msra.mxu0 0.0
    %96 = vmatprep.subr.mxu0 0.0
    %97 = vmatpush1.msra.mxu0 0.0
    %98 = vmatprep.subr.mxu0 0.0
    %99 = vmatpush1.msra.mxu0 0.0
    %100 = vmatprep.subr.mxu0 0.0
    %101 = vmatpush1.msra.mxu0 0.0
    %102 = vmatprep.subr.mxu0 0.0
    %103 = vmatpush1.msra.mxu0 0.0
    %104 = vmatprep.subr.mxu0 0.0
    %105 = vmatpush1.msra.mxu0 %v72
    %106 = vmatprep.subr.mxu0 0.0
    %107 = vmatpush2.msra.mxu0 0.0
    %108 = vmatprep.subr.mxu0 0.0
    %109 = vmatpush2.msra.mxu0 0.0
    %110 = vmatprep.subr.mxu0 0.0
    %111 = vmatpush2.msra.mxu0 0.0
    %112 = vmatprep.subr.mxu0 0.0
    %113 = vmatpush2.msra.mxu0 0.0
    %114 = vmatprep.subr.mxu0 0.0
    %115 = vmatpush2.msra.mxu0 0.0
    %116 = vmatprep.subr.mxu0 0.0
    %117 = vmatpush2.msra.mxu0 0.0
    %118 = vmatprep.subr.mxu0 0.0
    %119 = vmatpush2.msra.mxu0 0.0
    %120 = vmatprep.subr.mxu0 0.0
    %121 = vmatpush2.msra.mxu0 0.0
    %122 = vmatprep.subr.mxu0 0.0
    %123 = vmatpush2.msra.mxu0 0.0
    %124 = vmatprep.subr.mxu0 0.0
    %125 = vmatpush2.msra.mxu0 0.0
    %126 = vmatprep.subr.mxu0 0.0
    %127 = vmatpush2.msra.mxu0 0.0
    %128 = vmatprep.subr.mxu0 0.0
    %129 = vmatpush2.msra.mxu0 0.0
    %130 = vmatprep.subr.mxu0 0.0
    %131 = vmatpush2.msra.mxu0 0.0
    %132 = vmatprep.subr.mxu0 0.0
    %133 = vmatpush2.msra.mxu0 0.0
    %134 = vmatprep.subr.mxu0 0.0
    %135 = vmatpush2.msra.mxu0 0.0
    %136 = vmatprep.subr.mxu0 0.0
    %137 = vmatpush2.msra.mxu0 0.0
    %138 = vmatprep.mubr.f32.mxu0 0.0
    %139 = vmatmul.mubr.f32.gmra.mxu0 %v68
    %v140 = vpop.f32.mrf.mxu0
    %v141 = vadd.f32 %v64, %v140
    %v142 = vpop.f32.mrf.mxu0
    %143 = vdwg.mxu0
    %v144 = vtanh.pop %v141
    %v145 = vld [vmem:[%s12] sm:$0xff]
    %v146 = vld [vmem:[%s12 + $0x8] sm:$0xff]
    %v147 = vld [vmem:[%s12 + $0x10] sm:$0xff]
    %v148 = vld [vmem:[%s12 + $0x18] sm:$0xff]
    %vm149 = vcmask 261120
    %v151 = vsel %vm149, %v144, 0
    %153 = vmatprep.subr.mxu0 0.0
    %154 = vmatpush1.msra.mxu0 0.0
    %155 = vmatprep.subr.mxu0 0.0
    %156 = vmatpush1.msra.mxu0 0.0
    %157 = vmatprep.subr.mxu0 0.0
    %158 = vmatpush1.msra.mxu0 0.0
    %159 = vmatprep.subr.mxu0 0.0
    %160 = vmatpush1.msra.mxu0 0.0
    %161 = vmatprep.subr.mxu0 0.0
    %162 = vmatpush1.msra.mxu0 0.0
    %163 = vmatprep.subr.mxu0 0.0
    %164 = vmatpush1.msra.mxu0 0.0
    %165 = vmatprep.subr.mxu0 0.0
    %166 = vmatpush1.msra.mxu0 0.0
    %167 = vmatprep.subr.mxu0 0.0
    %168 = vmatpush1.msra.mxu0 0.0
    %169 = vmatprep.subr.mxu0 0.0
    %170 = vmatpush1.msra.mxu0 0.0
    %171 = vmatprep.subr.mxu0 0.0
    %172 = vmatpush1.msra.mxu0 0.0
    %173 = vmatprep.subr.mxu0 0.0
    %174 = vmatpush1.msra.mxu0 0.0
    %175 = vmatprep.subr.mxu0 0.0
    %176 = vmatpush1.msra.mxu0 0.0
    %177 = vmatprep.subr.mxu0 0.0
    %178 = vmatpush1.msra.mxu0 %v148
    %179 = vmatprep.subr.mxu0 0.0
    %180 = vmatpush1.msra.mxu0 %v147
    %181 = vmatprep.subr.mxu0 0.0
    %182 = vmatpush1.msra.mxu0 %v146
    %183 = vmatprep.subr.mxu0 0.0
    %184 = vmatpush1.msra.mxu0 %v145
    %185 = vmatprep.subr.mxu0 0.0
    %186 = vmatpush2.msra.mxu0 0.0
    %187 = vmatprep.subr.mxu0 0.0
    %188 = vmatpush2.msra.mxu0 0.0
    %189 = vmatprep.subr.mxu0 0.0
    %190 = vmatpush2.msra.mxu0 0.0
    %191 = vmatprep.subr.mxu0 0.0
    %192 = vmatpush2.msra.mxu0 0.0
    %193 = vmatprep.subr.mxu0 0.0
    %194 = vmatpush2.msra.mxu0 0.0
    %195 = vmatprep.subr.mxu0 0.0
    %196 = vmatpush2.msra.mxu0 0.0
    %197 = vmatprep.subr.mxu0 0.0
    %198 = vmatpush2.msra.mxu0 0.0
    %199 = vmatprep.subr.mxu0 0.0
    %200 = vmatpush2.msra.mxu0 0.0
    %201 = vmatprep.subr.mxu0 0.0
    %202 = vmatpush2.msra.mxu0 0.0
    %203 = vmatprep.subr.mxu0 0.0
    %204 = vmatpush2.msra.mxu0 0.0
    %205 = vmatprep.subr.mxu0 0.0
    %206 = vmatpush2.msra.mxu0 0.0
    %207 = vmatprep.subr.mxu0 0.0
    %208 = vmatpush2.msra.mxu0 0.0
    %209 = vmatprep.subr.mxu0 0.0
    %210 = vmatpush2.msra.mxu0 0.0
    %211 = vmatprep.subr.mxu0 0.0
    %212 = vmatpush2.msra.mxu0 0.0
    %213 = vmatprep.subr.mxu0 0.0
    %214 = vmatpush2.msra.mxu0 0.0
    %215 = vmatprep.subr.mxu0 0.0
    %216 = vmatpush2.msra.mxu0 0.0
    %217 = vmatprep.mubr.f32.mxu0 0.0
    %218 = vmatmul.mubr.f32.gmra.mxu0 %v151
    %v219 = vpop.f32.mrf.mxu0
    %v220 = vadd.f32 0.0, %v219
    %v221 = vpop.f32.mrf.mxu0
    %222 = vdwg.mxu0
    %v224 = vlaneseq
    %v225 = vshrl.u32 %v224, 7
    %v226 = vsub.s32 0, %v225
    %v227 = vrot.slane %v56, %v226
    %v229 = vadd.f32 %v227, %v220
    %v230 = vld [vmem:[%s1] sm:$0x3]
    %v231 = vld [vmem:[%s5] sm:$0xff]
    %v232 = vld [vmem:[%s5 + $0x8] sm:$0x3]
    %v233 = vld [vmem:[%s9] sm:$0x1]
    %v235 = vlaneseq
    %v236 = vshrl.u32 %v235, 7
    %v237 = vsub.s32 0, %v236
    %v238 = vrot.slane %v233, %v237
    %vm240 = vcmask 80896
    %v242 = vsel %vm240, %v230, 0
    %vm244 = vcmask 1041408
    %v246 = vsel %vm244, %v232, 0
    %248 = vmatprep.subr.mxu0 0.0
    %249 = vmatpush1.msra.mxu0 0.0
    %250 = vmatprep.subr.mxu0 0.0
    %251 = vmatpush1.msra.mxu0 0.0
    %252 = vmatprep.subr.mxu0 0.0
    %253 = vmatpush1.msra.mxu0 0.0
    %254 = vmatprep.subr.mxu0 0.0
    %255 = vmatpush1.msra.mxu0 0.0
    %256 = vmatprep.subr.mxu0 0.0
    %257 = vmatpush1.msra.mxu0 0.0
    %258 = vmatprep.subr.mxu0 0.0
    %259 = vmatpush1.msra.mxu0 0.0
    %260 = vmatprep.subr.mxu0 0.0
    %261 = vmatpush1.msra.mxu0 0.0
    %262 = vmatprep.subr.mxu0 0.0
    %263 = vmatpush1.msra.mxu0 0.0
    %264 = vmatprep.subr.mxu0 0.0
    %265 = vmatpush1.msra.mxu0 0.0
    %266 = vmatprep.subr.mxu0 0.0
    %267 = vmatpush1.msra.mxu0 0.0
    %268 = vmatprep.subr.mxu0 0.0
    %269 = vmatpush1.msra.mxu0 0.0
    %270 = vmatprep.subr.mxu0 0.0
    %271 = vmatpush1.msra.mxu0 0.0
    %272 = vmatprep.subr.mxu0 0.0
    %273 = vmatpush1.msra.mxu0 0.0
    %274 = vmatprep.subr.mxu0 0.0
    %275 = vmatpush1.msra.mxu0 0.0
    %276 = vmatprep.subr.mxu0 0.0
    %277 = vmatpush1.msra.mxu0 %v246
    %278 = vmatprep.subr.mxu0 0.0
    %279 = vmatpush1.msra.mxu0 %v231
    %280 = vmatprep.subr.mxu0 0.0
    %281 = vmatpush2.msra.mxu0 0.0
    %282 = vmatprep.subr.mxu0 0.0
    %283 = vmatpush2.msra.mxu0 0.0
    %284 = vmatprep.subr.mxu0 0.0
    %285 = vmatpush2.msra.mxu0 0.0
    %286 = vmatprep.subr.mxu0 0.0
    %287 = vmatpush2.msra.mxu0 0.0
    %288 = vmatprep.subr.mxu0 0.0
    %289 = vmatpush2.msra.mxu0 0.0
    %290 = vmatprep.subr.mxu0 0.0
    %291 = vmatpush2.msra.mxu0 0.0
    %292 = vmatprep.subr.mxu0 0.0
    %293 = vmatpush2.msra.mxu0 0.0
    %294 = vmatprep.subr.mxu0 0.0
    %295 = vmatpush2.msra.mxu0 0.0
    %296 = vmatprep.subr.mxu0 0.0
    %297 = vmatpush2.msra.mxu0 0.0
    %298 = vmatprep.subr.mxu0 0.0
    %299 = vmatpush2.msra.mxu0 0.0
    %300 = vmatprep.subr.mxu0 0.0
    %301 = vmatpush2.msra.mxu0 0.0
    %302 = vmatprep.subr.mxu0 0.0
    %303 = vmatpush2.msra.mxu0 0.0
    %304 = vmatprep.subr.mxu0 0.0
    %305 = vmatpush2.msra.mxu0 0.0
    %306 = vmatprep.subr.mxu0 0.0
    %307 = vmatpush2.msra.mxu0 0.0
    %308 = vmatprep.subr.mxu0 0.0
    %309 = vmatpush2.msra.mxu0 0.0
    %310 = vmatprep.subr.mxu0 0.0
    %311 = vmatpush2.msra.mxu0 0.0
    %312 = vmatprep.mubr.f32.mxu0 0.0
    %313 = vmatmul.mubr.f32.gmra.mxu0 %v242
    %v314 = vpop.f32.mrf.mxu0
    %v315 = vadd.f32 %v238, %v314
    %v316 = vpop.f32.mrf.mxu0
    %317 = vdwg.mxu0
    %v318 = vtanh.pop %v315
    %v319 = vld [vmem:[%s12 + $0x20] sm:$0xff]
    %v320 = vld [vmem:[%s12 + $0x28] sm:$0xff]
    %v321 = vld [vmem:[%s12 + $0x30] sm:$0xff]
    %v322 = vld [vmem:[%s12 + $0x38] sm:$0xff]
    %v324 = vsel %vm149, %v318, 0
    %326 = vmatprep.subr.mxu0 0.0
    %327 = vmatpush1.msra.mxu0 0.0
    %328 = vmatprep.subr.mxu0 0.0
    %329 = vmatpush1.msra.mxu0 0.0
    %330 = vmatprep.subr.mxu0 0.0
    %331 = vmatpush1.msra.mxu0 0.0
    %332 = vmatprep.subr.mxu0 0.0
    %333 = vmatpush1.msra.mxu0 0.0
    %334 = vmatprep.subr.mxu0 0.0
    %335 = vmatpush1.msra.mxu0 0.0
    %336 = vmatprep.subr.mxu0 0.0
    %337 = vmatpush1.msra.mxu0 0.0
    %338 = vmatprep.subr.mxu0 0.0
    %339 = vmatpush1.msra.mxu0 0.0
    %340 = vmatprep.subr.mxu0 0.0
    %341 = vmatpush1.msra.mxu0 0.0
    %342 = vmatprep.subr.mxu0 0.0
    %343 = vmatpush1.msra.mxu0 0.0
    %344 = vmatprep.subr.mxu0 0.0
    %345 = vmatpush1.msra.mxu0 0.0
    %346 = vmatprep.subr.mxu0 0.0
    %347 = vmatpush1.msra.mxu0 0.0
    %348 = vmatprep.subr.mxu0 0.0
    %349 = vmatpush1.msra.mxu0 0.0
    %350 = vmatprep.subr.mxu0 0.0
    %351 = vmatpush1.msra.mxu0 %v322
    %352 = vmatprep.subr.mxu0 0.0
    %353 = vmatpush1.msra.mxu0 %v321
    %354 = vmatprep.subr.mxu0 0.0
    %355 = vmatpush1.msra.mxu0 %v320
    %356 = vmatprep.subr.mxu0 0.0
    %357 = vmatpush1.msra.mxu0 %v319
    %358 = vmatprep.subr.mxu0 0.0
    %359 = vmatpush2.msra.mxu0 0.0
    %360 = vmatprep.subr.mxu0 0.0
    %361 = vmatpush2.msra.mxu0 0.0
    %362 = vmatprep.subr.mxu0 0.0
    %363 = vmatpush2.msra.mxu0 0.0
    %364 = vmatprep.subr.mxu0 0.0
    %365 = vmatpush2.msra.mxu0 0.0
    %366 = vmatprep.subr.mxu0 0.0
    %367 = vmatpush2.msra.mxu0 0.0
    %368 = vmatprep.subr.mxu0 0.0
    %369 = vmatpush2.msra.mxu0 0.0
    %370 = vmatprep.subr.mxu0 0.0
    %371 = vmatpush2.msra.mxu0 0.0
    %372 = vmatprep.subr.mxu0 0.0
    %373 = vmatpush2.msra.mxu0 0.0
    %374 = vmatprep.subr.mxu0 0.0
    %375 = vmatpush2.msra.mxu0 0.0
    %376 = vmatprep.subr.mxu0 0.0
    %377 = vmatpush2.msra.mxu0 0.0
    %378 = vmatprep.subr.mxu0 0.0
    %379 = vmatpush2.msra.mxu0 0.0
    %380 = vmatprep.subr.mxu0 0.0
    %381 = vmatpush2.msra.mxu0 0.0
    %382 = vmatprep.subr.mxu0 0.0
    %383 = vmatpush2.msra.mxu0 0.0
    %384 = vmatprep.subr.mxu0 0.0
    %385 = vmatpush2.msra.mxu0 0.0
    %386 = vmatprep.subr.mxu0 0.0
    %387 = vmatpush2.msra.mxu0 0.0
    %388 = vmatprep.subr.mxu0 0.0
    %389 = vmatpush2.msra.mxu0 0.0
    %390 = vmatprep.mubr.f32.mxu0 0.0
    %391 = vmatmul.mubr.f32.gmra.mxu0 %v324
    %v392 = vpop.f32.mrf.mxu0
    %v393 = vadd.f32 0.0, %v392
    %v394 = vpop.f32.mrf.mxu0
    %395 = vdwg.mxu0
    %v396 = vadd.f32 %v229, %v393
    %v397 = vld [vmem:[%s2] sm:$0x3]
    %v398 = vld [vmem:[%s6] sm:$0xf]
    %v399 = vld [vmem:[%s10] sm:$0x1]
    %v401 = vlaneseq
    %v402 = vshrl.u32 %v401, 7
    %v403 = vsub.s32 0, %v402
    %v404 = vrot.slane %v399, %v403
    %vm406 = vcmask 31744
    %v408 = vsel %vm406, %v397, 0
    %vm410 = vcmask 1043456
    %v412 = vsel %vm410, %v398, 0
    %414 = vmatprep.subr.mxu0 0.0
    %415 = vmatpush1.msra.mxu0 0.0
    %416 = vmatprep.subr.mxu0 0.0
    %417 = vmatpush1.msra.mxu0 0.0
    %418 = vmatprep.subr.mxu0 0.0
    %419 = vmatpush1.msra.mxu0 0.0
    %420 = vmatprep.subr.mxu0 0.0
    %421 = vmatpush1.msra.mxu0 0.0
    %422 = vmatprep.subr.mxu0 0.0
    %423 = vmatpush1.msra.mxu0 0.0
    %424 = vmatprep.subr.mxu0 0.0
    %425 = vmatpush1.msra.mxu0 0.0
    %426 = vmatprep.subr.mxu0 0.0
    %427 = vmatpush1.msra.mxu0 0.0
    %428 = vmatprep.subr.mxu0 0.0
    %429 = vmatpush1.msra.mxu0 0.0
    %430 = vmatprep.subr.mxu0 0.0
    %431 = vmatpush1.msra.mxu0 0.0
    %432 = vmatprep.subr.mxu0 0.0
    %433 = vmatpush1.msra.mxu0 0.0
    %434 = vmatprep.subr.mxu0 0.0
    %435 = vmatpush1.msra.mxu0 0.0
    %436 = vmatprep.subr.mxu0 0.0
    %437 = vmatpush1.msra.mxu0 0.0
    %438 = vmatprep.subr.mxu0 0.0
    %439 = vmatpush1.msra.mxu0 0.0
    %440 = vmatprep.subr.mxu0 0.0
    %441 = vmatpush1.msra.mxu0 0.0
    %442 = vmatprep.subr.mxu0 0.0
    %443 = vmatpush1.msra.mxu0 0.0
    %444 = vmatprep.subr.mxu0 0.0
    %445 = vmatpush1.msra.mxu0 %v412
    %446 = vmatprep.subr.mxu0 0.0
    %447 = vmatpush2.msra.mxu0 0.0
    %448 = vmatprep.subr.mxu0 0.0
    %449 = vmatpush2.msra.mxu0 0.0
    %450 = vmatprep.subr.mxu0 0.0
    %451 = vmatpush2.msra.mxu0 0.0
    %452 = vmatprep.subr.mxu0 0.0
    %453 = vmatpush2.msra.mxu0 0.0
    %454 = vmatprep.subr.mxu0 0.0
    %455 = vmatpush2.msra.mxu0 0.0
    %456 = vmatprep.subr.mxu0 0.0
    %457 = vmatpush2.msra.mxu0 0.0
    %458 = vmatprep.subr.mxu0 0.0
    %459 = vmatpush2.msra.mxu0 0.0
    %460 = vmatprep.subr.mxu0 0.0
    %461 = vmatpush2.msra.mxu0 0.0
    %462 = vmatprep.subr.mxu0 0.0
    %463 = vmatpush2.msra.mxu0 0.0
    %464 = vmatprep.subr.mxu0 0.0
    %465 = vmatpush2.msra.mxu0 0.0
    %466 = vmatprep.subr.mxu0 0.0
    %467 = vmatpush2.msra.mxu0 0.0
    %468 = vmatprep.subr.mxu0 0.0
    %469 = vmatpush2.msra.mxu0 0.0
    %470 = vmatprep.subr.mxu0 0.0
    %471 = vmatpush2.msra.mxu0 0.0
    %472 = vmatprep.subr.mxu0 0.0
    %473 = vmatpush2.msra.mxu0 0.0
    %474 = vmatprep.subr.mxu0 0.0
    %475 = vmatpush2.msra.mxu0 0.0
    %476 = vmatprep.subr.mxu0 0.0
    %477 = vmatpush2.msra.mxu0 0.0
    %478 = vmatprep.mubr.f32.mxu0 0.0
    %479 = vmatmul.mubr.f32.gmra.mxu0 %v408
    %v480 = vpop.f32.mrf.mxu0
    %v481 = vadd.f32 %v404, %v480
    %v482 = vpop.f32.mrf.mxu0
    %483 = vdwg.mxu0
    %v484 = vtanh.pop %v481
    %v485 = vld [vmem:[%s12 + $0x40] sm:$0xff]
    %v486 = vld [vmem:[%s12 + $0x48] sm:$0xff]
    %v487 = vld [vmem:[%s12 + $0x50] sm:$0xff]
    %v488 = vld [vmem:[%s12 + $0x58] sm:$0xff]
    %v490 = vsel %vm149, %v484, 0
    %492 = vmatprep.subr.mxu0 0.0
    %493 = vmatpush1.msra.mxu0 0.0
    %494 = vmatprep.subr.mxu0 0.0
    %495 = vmatpush1.msra.mxu0 0.0
    %496 = vmatprep.subr.mxu0 0.0
    %497 = vmatpush1.msra.mxu0 0.0
    %498 = vmatprep.subr.mxu0 0.0
    %499 = vmatpush1.msra.mxu0 0.0
    %500 = vmatprep.subr.mxu0 0.0
    %501 = vmatpush1.msra.mxu0 0.0
    %502 = vmatprep.subr.mxu0 0.0
    %503 = vmatpush1.msra.mxu0 0.0
    %504 = vmatprep.subr.mxu0 0.0
    %505 = vmatpush1.msra.mxu0 0.0
    %506 = vmatprep.subr.mxu0 0.0
    %507 = vmatpush1.msra.mxu0 0.0
    %508 = vmatprep.subr.mxu0 0.0
    %509 = vmatpush1.msra.mxu0 0.0
    %510 = vmatprep.subr.mxu0 0.0
    %511 = vmatpush1.msra.mxu0 0.0
    %512 = vmatprep.subr.mxu0 0.0
    %513 = vmatpush1.msra.mxu0 0.0
    %514 = vmatprep.subr.mxu0 0.0
    %515 = vmatpush1.msra.mxu0 0.0
    %516 = vmatprep.subr.mxu0 0.0
    %517 = vmatpush1.msra.mxu0 %v488
    %518 = vmatprep.subr.mxu0 0.0
    %519 = vmatpush1.msra.mxu0 %v487
    %520 = vmatprep.subr.mxu0 0.0
    %521 = vmatpush1.msra.mxu0 %v486
    %522 = vmatprep.subr.mxu0 0.0
    %523 = vmatpush1.msra.mxu0 %v485
    %524 = vmatprep.subr.mxu0 0.0
    %525 = vmatpush2.msra.mxu0 0.0
    %526 = vmatprep.subr.mxu0 0.0
    %527 = vmatpush2.msra.mxu0 0.0
    %528 = vmatprep.subr.mxu0 0.0
    %529 = vmatpush2.msra.mxu0 0.0
    %530 = vmatprep.subr.mxu0 0.0
    %531 = vmatpush2.msra.mxu0 0.0
    %532 = vmatprep.subr.mxu0 0.0
    %533 = vmatpush2.msra.mxu0 0.0
    %534 = vmatprep.subr.mxu0 0.0
    %535 = vmatpush2.msra.mxu0 0.0
    %536 = vmatprep.subr.mxu0 0.0
    %537 = vmatpush2.msra.mxu0 0.0
    %538 = vmatprep.subr.mxu0 0.0
    %539 = vmatpush2.msra.mxu0 0.0
    %540 = vmatprep.subr.mxu0 0.0
    %541 = vmatpush2.msra.mxu0 0.0
    %542 = vmatprep.subr.mxu0 0.0
    %543 = vmatpush2.msra.mxu0 0.0
    %544 = vmatprep.subr.mxu0 0.0
    %545 = vmatpush2.msra.mxu0 0.0
    %546 = vmatprep.subr.mxu0 0.0
    %547 = vmatpush2.msra.mxu0 0.0
    %548 = vmatprep.subr.mxu0 0.0
    %549 = vmatpush2.msra.mxu0 0.0
    %550 = vmatprep.subr.mxu0 0.0
    %551 = vmatpush2.msra.mxu0 0.0
    %552 = vmatprep.subr.mxu0 0.0
    %553 = vmatpush2.msra.mxu0 0.0
    %554 = vmatprep.subr.mxu0 0.0
    %555 = vmatpush2.msra.mxu0 0.0
    %556 = vmatprep.mubr.f32.mxu0 0.0
    %557 = vmatmul.mubr.f32.gmra.mxu0 %v490
    %v558 = vpop.f32.mrf.mxu0
    %v559 = vadd.f32 0.0, %v558
    %v560 = vpop.f32.mrf.mxu0
    %561 = vdwg.mxu0
    %v562 = vadd.f32 %v396, %v559
    %v563 = vld [vmem:[%s3] sm:$0x3]
    %v564 = vld [vmem:[%s7] sm:$0xf]
    %v565 = vld [vmem:[%s11] sm:$0x1]
    %v567 = vlaneseq
    %v568 = vshrl.u32 %v567, 7
    %v569 = vsub.s32 0, %v568
    %v570 = vrot.slane %v565, %v569
    %v573 = vsel %vm406, %v563, 0
    %v576 = vsel %vm410, %v564, 0
    %578 = vmatprep.subr.mxu0 0.0
    %579 = vmatpush1.msra.mxu0 0.0
    %580 = vmatprep.subr.mxu0 0.0
    %581 = vmatpush1.msra.mxu0 0.0
    %582 = vmatprep.subr.mxu0 0.0
    %583 = vmatpush1.msra.mxu0 0.0
    %584 = vmatprep.subr.mxu0 0.0
    %585 = vmatpush1.msra.mxu0 0.0
    %586 = vmatprep.subr.mxu0 0.0
    %587 = vmatpush1.msra.mxu0 0.0
    %588 = vmatprep.subr.mxu0 0.0
    %589 = vmatpush1.msra.mxu0 0.0
    %590 = vmatprep.subr.mxu0 0.0
    %591 = vmatpush1.msra.mxu0 0.0
    %592 = vmatprep.subr.mxu0 0.0
    %593 = vmatpush1.msra.mxu0 0.0
    %594 = vmatprep.subr.mxu0 0.0
    %595 = vmatpush1.msra.mxu0 0.0
    %596 = vmatprep.subr.mxu0 0.0
    %597 = vmatpush1.msra.mxu0 0.0
    %598 = vmatprep.subr.mxu0 0.0
    %599 = vmatpush1.msra.mxu0 0.0
    %600 = vmatprep.subr.mxu0 0.0
    %601 = vmatpush1.msra.mxu0 0.0
    %602 = vmatprep.subr.mxu0 0.0
    %603 = vmatpush1.msra.mxu0 0.0
    %604 = vmatprep.subr.mxu0 0.0
    %605 = vmatpush1.msra.mxu0 0.0
    %606 = vmatprep.subr.mxu0 0.0
    %607 = vmatpush1.msra.mxu0 0.0
    %608 = vmatprep.subr.mxu0 0.0
    %609 = vmatpush1.msra.mxu0 %v576
    %610 = vmatprep.subr.mxu0 0.0
    %611 = vmatpush2.msra.mxu0 0.0
    %612 = vmatprep.subr.mxu0 0.0
    %613 = vmatpush2.msra.mxu0 0.0
    %614 = vmatprep.subr.mxu0 0.0
    %615 = vmatpush2.msra.mxu0 0.0
    %616 = vmatprep.subr.mxu0 0.0
    %617 = vmatpush2.msra.mxu0 0.0
    %618 = vmatprep.subr.mxu0 0.0
    %619 = vmatpush2.msra.mxu0 0.0
    %620 = vmatprep.subr.mxu0 0.0
    %621 = vmatpush2.msra.mxu0 0.0
    %622 = vmatprep.subr.mxu0 0.0
    %623 = vmatpush2.msra.mxu0 0.0
    %624 = vmatprep.subr.mxu0 0.0
    %625 = vmatpush2.msra.mxu0 0.0
    %626 = vmatprep.subr.mxu0 0.0
    %627 = vmatpush2.msra.mxu0 0.0
    %628 = vmatprep.subr.mxu0 0.0
    %629 = vmatpush2.msra.mxu0 0.0
    %630 = vmatprep.subr.mxu0 0.0
    %631 = vmatpush2.msra.mxu0 0.0
    %632 = vmatprep.subr.mxu0 0.0
    %633 = vmatpush2.msra.mxu0 0.0
    %634 = vmatprep.subr.mxu0 0.0
    %635 = vmatpush2.msra.mxu0 0.0
    %636 = vmatprep.subr.mxu0 0.0
    %637 = vmatpush2.msra.mxu0 0.0
    %638 = vmatprep.subr.mxu0 0.0
    %639 = vmatpush2.msra.mxu0 0.0
    %640 = vmatprep.subr.mxu0 0.0
    %641 = vmatpush2.msra.mxu0 0.0
    %642 = vmatprep.mubr.f32.mxu0 0.0
    %643 = vmatmul.mubr.f32.gmra.mxu0 %v573
    %v644 = vpop.f32.mrf.mxu0
    %v645 = vadd.f32 %v570, %v644
    %v646 = vpop.f32.mrf.mxu0
    %647 = vdwg.mxu0
    %v648 = vtanh.pop %v645
    %v649 = vld [vmem:[%s12 + $0x60] sm:$0xff]
    %v650 = vld [vmem:[%s12 + $0x68] sm:$0xff]
    %v651 = vld [vmem:[%s12 + $0x70] sm:$0xff]
    %v652 = vld [vmem:[%s12 + $0x78] sm:$0xff]
    %v654 = vsel %vm149, %v648, 0
    %656 = vmatprep.subr.mxu0 0.0
    %657 = vmatpush1.msra.mxu0 0.0
    %658 = vmatprep.subr.mxu0 0.0
    %659 = vmatpush1.msra.mxu0 0.0
    %660 = vmatprep.subr.mxu0 0.0
    %661 = vmatpush1.msra.mxu0 0.0
    %662 = vmatprep.subr.mxu0 0.0
    %663 = vmatpush1.msra.mxu0 0.0
    %664 = vmatprep.subr.mxu0 0.0
    %665 = vmatpush1.msra.mxu0 0.0
    %666 = vmatprep.subr.mxu0 0.0
    %667 = vmatpush1.msra.mxu0 0.0
    %668 = vmatprep.subr.mxu0 0.0
    %669 = vmatpush1.msra.mxu0 0.0
    %670 = vmatprep.subr.mxu0 0.0
    %671 = vmatpush1.msra.mxu0 0.0
    %672 = vmatprep.subr.mxu0 0.0
    %673 = vmatpush1.msra.mxu0 0.0
    %674 = vmatprep.subr.mxu0 0.0
    %675 = vmatpush1.msra.mxu0 0.0
    %676 = vmatprep.subr.mxu0 0.0
    %677 = vmatpush1.msra.mxu0 0.0
    %678 = vmatprep.subr.mxu0 0.0
    %679 = vmatpush1.msra.mxu0 0.0
    %680 = vmatprep.subr.mxu0 0.0
    %681 = vmatpush1.msra.mxu0 %v652
    %682 = vmatprep.subr.mxu0 0.0
    %683 = vmatpush1.msra.mxu0 %v651
    %684 = vmatprep.subr.mxu0 0.0
    %685 = vmatpush1.msra.mxu0 %v650
    %686 = vmatprep.subr.mxu0 0.0
    %687 = vmatpush1.msra.mxu0 %v649
    %688 = vmatprep.subr.mxu0 0.0
    %689 = vmatpush2.msra.mxu0 0.0
    %690 = vmatprep.subr.mxu0 0.0
    %691 = vmatpush2.msra.mxu0 0.0
    %692 = vmatprep.subr.mxu0 0.0
    %693 = vmatpush2.msra.mxu0 0.0
    %694 = vmatprep.subr.mxu0 0.0
    %695 = vmatpush2.msra.mxu0 0.0
    %696 = vmatprep.subr.mxu0 0.0
    %697 = vmatpush2.msra.mxu0 0.0
    %698 = vmatprep.subr.mxu0 0.0
    %699 = vmatpush2.msra.mxu0 0.0
    %700 = vmatprep.subr.mxu0 0.0
    %701 = vmatpush2.msra.mxu0 0.0
    %702 = vmatprep.subr.mxu0 0.0
    %703 = vmatpush2.msra.mxu0 0.0
    %704 = vmatprep.subr.mxu0 0.0
    %705 = vmatpush2.msra.mxu0 0.0
    %706 = vmatprep.subr.mxu0 0.0
    %707 = vmatpush2.msra.mxu0 0.0
    %708 = vmatprep.subr.mxu0 0.0
    %709 = vmatpush2.msra.mxu0 0.0
    %710 = vmatprep.subr.mxu0 0.0
    %711 = vmatpush2.msra.mxu0 0.0
    %712 = vmatprep.subr.mxu0 0.0
    %713 = vmatpush2.msra.mxu0 0.0
    %714 = vmatprep.subr.mxu0 0.0
    %715 = vmatpush2.msra.mxu0 0.0
    %716 = vmatprep.subr.mxu0 0.0
    %717 = vmatpush2.msra.mxu0 0.0
    %718 = vmatprep.subr.mxu0 0.0
    %719 = vmatpush2.msra.mxu0 0.0
    %720 = vmatprep.mubr.f32.mxu0 0.0
    %721 = vmatmul.mubr.f32.gmra.mxu0 %v654
    %v722 = vpop.f32.mrf.mxu0
    %v723 = vadd.f32 0.0, %v722
    %v724 = vpop.f32.mrf.mxu0
    %725 = vdwg.mxu0
    %v726 = vadd.f32 %v562, %v723
    %v727 = vtanh.pop %v726
    %v728 = vld [vmem:[%s14] sm:$0x1]
    %v729 = vld [vmem:[#allocation2] sm:$0x1]
    %731 = vset.pattern.permute.xlu0 0
    %732 = vperm.xlu0 %731, %v729
    %v733 = vpop.permute.xlu0 %732
    %v735 = vlaneseq
    %v736 = vshrl.u32 %v735, 7
    %v737 = vsub.s32 0, %v736
    %v738 = vrot.slane %v733, %v737
    %v740 = vsel %vm149, %v728, 0
    %v743 = vsel %vm149, %v727, 0
    %745 = vmatprep.subr.mxu0 0.0
    %746 = vmatpush1.xpose.msra.mxu0 0.0
    %747 = vmatprep.subr.mxu0 0.0
    %748 = vmatpush1.xpose.msra.mxu0 0.0
    %749 = vmatprep.subr.mxu0 0.0
    %750 = vmatpush1.xpose.msra.mxu0 0.0
    %751 = vmatprep.subr.mxu0 0.0
    %752 = vmatpush1.xpose.msra.mxu0 0.0
    %753 = vmatprep.subr.mxu0 0.0
    %754 = vmatpush1.xpose.msra.mxu0 0.0
    %755 = vmatprep.subr.mxu0 0.0
    %756 = vmatpush1.xpose.msra.mxu0 0.0
    %757 = vmatprep.subr.mxu0 0.0
    %758 = vmatpush1.xpose.msra.mxu0 0.0
    %759 = vmatprep.subr.mxu0 0.0
    %760 = vmatpush1.xpose.msra.mxu0 0.0
    %761 = vmatprep.subr.mxu0 0.0
    %762 = vmatpush1.xpose.msra.mxu0 0.0
    %763 = vmatprep.subr.mxu0 0.0
    %764 = vmatpush1.xpose.msra.mxu0 0.0
    %765 = vmatprep.subr.mxu0 0.0
    %766 = vmatpush1.xpose.msra.mxu0 0.0
    %767 = vmatprep.subr.mxu0 0.0
    %768 = vmatpush1.xpose.msra.mxu0 0.0
    %769 = vmatprep.subr.mxu0 0.0
    %770 = vmatpush1.xpose.msra.mxu0 0.0
    %771 = vmatprep.subr.mxu0 0.0
    %772 = vmatpush1.xpose.msra.mxu0 0.0
    %773 = vmatprep.subr.mxu0 0.0
    %774 = vmatpush1.xpose.msra.mxu0 0.0
    %775 = vmatprep.subr.mxu0 0.0
    %776 = vmatpush1.xpose.msra.mxu0 %v743
    %777 = vmatprep.subr.mxu0 0.0
    %778 = vmatpush2.xpose.msra.mxu0 0.0
    %779 = vmatprep.subr.mxu0 0.0
    %780 = vmatpush2.xpose.msra.mxu0 0.0
    %781 = vmatprep.subr.mxu0 0.0
    %782 = vmatpush2.xpose.msra.mxu0 0.0
    %783 = vmatprep.subr.mxu0 0.0
    %784 = vmatpush2.xpose.msra.mxu0 0.0
    %785 = vmatprep.subr.mxu0 0.0
    %786 = vmatpush2.xpose.msra.mxu0 0.0
    %787 = vmatprep.subr.mxu0 0.0
    %788 = vmatpush2.xpose.msra.mxu0 0.0
    %789 = vmatprep.subr.mxu0 0.0
    %790 = vmatpush2.xpose.msra.mxu0 0.0
    %791 = vmatprep.subr.mxu0 0.0
    %792 = vmatpush2.xpose.msra.mxu0 0.0
    %793 = vmatprep.subr.mxu0 0.0
    %794 = vmatpush2.xpose.msra.mxu0 0.0
    %795 = vmatprep.subr.mxu0 0.0
    %796 = vmatpush2.xpose.msra.mxu0 0.0
    %797 = vmatprep.subr.mxu0 0.0
    %798 = vmatpush2.xpose.msra.mxu0 0.0
    %799 = vmatprep.subr.mxu0 0.0
    %800 = vmatpush2.xpose.msra.mxu0 0.0
    %801 = vmatprep.subr.mxu0 0.0
    %802 = vmatpush2.xpose.msra.mxu0 0.0
    %803 = vmatprep.subr.mxu0 0.0
    %804 = vmatpush2.xpose.msra.mxu0 0.0
    %805 = vmatprep.subr.mxu0 0.0
    %806 = vmatpush2.xpose.msra.mxu0 0.0
    %807 = vmatprep.subr.mxu0 0.0
    %808 = vmatpush2.xpose.msra.mxu0 0.0
    %809 = vmatprep.mubr.f32.mxu0 0.0
    %810 = vmatmul.mubr.f32.gmra.mxu0 %v740
    %v811 = vpop.f32.mrf.mxu0
    %v812 = vadd.f32 %v738, %v811
    %v813 = vpop.f32.mrf.mxu0
    %814 = vdwg.mxu0
    %vm815 = vcmask 8192
    %816 = vst.msk [vmem:[#allocation3] sm:$0x1] %vm815, %v812
    // Predicated region
    $region66: #{tpu_custom_call.1} parent=1 // pred_check
      _
    $region67: #{tpu_custom_call.1} parent=1 // pred_check_branch
      %818 = sbr.rel (0) target = $region69
    $region68: #{tpu_custom_call.1} parent=1 // pred_region
      %s820 = ssub.s32 16, 16
      %821 = vsyncadd [#allocation4], %s820
      %s823 = sshll.u32 [#allocation3], 4
      %s824 = int_to_ptr.vmem [resolvable:$true] %s823
      %826 = dma.vmem_to_hbm [thread:$0]  %s824, 16, %s16, [#allocation4]
    $region69: #{tpu_custom_call.1} parent=1 // pred_fallthru
      _
    // Predicated region
    $region70: #{tpu_custom_call.1} parent=1 // pred_check
      _
    $region71: #{tpu_custom_call.1} parent=1 // pred_check_branch
      %828 = sbr.rel (0) target = $region73
    $region72: #{tpu_custom_call.1} parent=1 // pred_region
      %829 = dma.done [#allocation4], 16
    $region73: #{tpu_custom_call.1} parent=1 // pred_fallthru
      _
    %830 = vsyncpa [#allocation4], 1

</llo_original>
